<compile_context>
chip_gen: v6e
topology: v6e:2x2x1
jax: 0.10.0
libtpu: 0.0.40
codegen_flags: <defaults>
</compile_context>

<pallas_src>
import jax
import jax.numpy as jnp
from jax import lax
from jax.experimental import pallas as pl
from jax.experimental.pallas import tpu as pltpu

# ----------------------------- small config ---------------------------------
B = 2              # batch (number of dialogues / images)
T = 16             # LLM sequence length
V = 128            # synthetic LLM vocab size
LC = 8             # CLIP token sequence length
VC = 128           # synthetic CLIP vocab size
D = 32             # CLIP text-embedding hidden size
DP = 128           # lane-padded hidden size (multiple of 128)
C, H, W = 4, 8, 8  # VAE latent channels / spatial
HW = H * W
CHW = C * HW       # 256 -> lane-dense (multiple of 128)
N_TOK = B * (T - 1)
VAE_SCALING = 0.18215
NUM_TRAIN_TIMESTEPS = 1000


# ------------------------ single fused forward kernel ------------------------
def fused_forward_kernel(
    logits_ref,     # VMEM [N_TOK, V]      f32   LLM logits (shifted)
    tgt_mask_ref,   # VMEM [N_TOK, 2]      i32   col0 = targets, col1 = mask
    clip_ids_ref,   # VMEM [B*LC, 1]       i32   CLIP token ids
    tok_emb_ref,    # VMEM [VC, DP]        bf16  CLIP token embedding (padded)
    pos_emb_ref,    # VMEM [LC, DP]        bf16  CLIP position embedding (padded)
    lat_noise_ref,  # VMEM [2, B, CHW]     bf16  [0]=VAE latents, [1]=noise
    scales_ref,     # SMEM [2*B]           f32   [sqrt(acp)*vae_scale | sqrt(1-acp)]
    loss_ref,       # SMEM [1]             f32   total loss (text + image)
    emb_ref,        # VMEM [B*LC, DP]      bf16  imgs_desc_embeddings (padded)
    noisy_ref,      # VMEM [B, CHW]        bf16  noisy latents
):
    # ---- 1) masked token-level cross entropy (text_loss, average='token') ---
    logits = logits_ref[...]                                   # [N, V] f32
    tm = tgt_mask_ref[...]                                     # [N, 2] i32
    tgt = tm[:, 0:1]                                           # [N, 1] i32
    w = tm[:, 1:2].astype(jnp.float32)                         # [N, 1] f32
    m = jnp.max(logits, axis=-1, keepdims=True)
    lse = m + jnp.log(jnp.sum(jnp.exp(logits - m), axis=-1, keepdims=True))
    col = lax.broadcasted_iota(jnp.int32, logits.shape, 1)     # one-hot-free
    tgt_logit = jnp.sum(jnp.where(col == tgt, logits, 0.0),
                        axis=-1, keepdims=True)
    ce = lse - tgt_logit                                       # [N, 1]
    num = jnp.sum(ce * w)
    den = jnp.sum(w)
    safe_den = jnp.where(den > 0.0, den, 1.0)
    text_loss = jnp.where(den > 0.0, num / safe_den, 0.0)

    # ---- 2) CLIP "soft-id" embeddings: one-hot(ids) @ token_emb + pos_emb ---
    # Forward value of the straight-through chain in _llm_logits_to_clip_ids /
    # _get_images_description_embedding is exactly this row selection; the
    # decode / re-encode and sparse vocab-conversion matmul only shape grads.
    ids = clip_ids_ref[...]                                    # [B*LC, 1] i32
    vcol = lax.broadcasted_iota(jnp.int32, (B * LC, VC), 1)
    one_hot = jnp.where(vcol == ids, 1.0, 0.0).astype(jnp.bfloat16)
    emb = jnp.dot(one_hot, tok_emb_ref[...],
                  preferred_element_type=jnp.float32)          # [B*LC, DP] f32
    pos = pos_emb_ref[...].astype(jnp.float32)                 # [LC, DP] f32
    emb = emb + jnp.concatenate([pos] * B, axis=0)             # f32 add (v5e ok)
    emb_ref[...] = emb.astype(emb_ref.dtype)                   # one unmasked store

    # ---- 3) DDPM add_noise (VAE scaling pre-folded) + fused MSE -------------
    lat = lat_noise_ref[0].astype(jnp.float32)                 # [B, CHW]
    nz = lat_noise_ref[1].astype(jnp.float32)                  # [B, CHW]
    row = lax.broadcasted_iota(jnp.int32, (B, CHW), 0)
    sa = jnp.zeros((B, CHW), jnp.float32)
    s1 = jnp.zeros((B, CHW), jnp.float32)
    for b in range(B):                                         # 2*B cheap selects
        sa = jnp.where(row == b, scales_ref[b], sa)
        s1 = jnp.where(row == b, scales_ref[B + b], s1)
    noisy = sa * lat + s1 * nz                                 # f32
    noisy_ref[...] = noisy.astype(noisy_ref.dtype)
    # TODO(synk): noises_pred uses an identity surrogate for the UNet denoiser;
    # MSE is computed on the (f32, un-rounded) noisy latents, fused in-register.
    d = noisy - nz
    image_loss = jnp.sum(d * d) * (1.0 / float(B * CHW))

    loss_ref[0] = text_loss + image_loss                       # SMEM scalar out


# ------------------------------- forward glue --------------------------------
def joint_generater_forward(llm_logits, input_ids, attention_mask,
                            clip_ids, clip_token_emb, clip_pos_emb,
                            latents, noises, timesteps,
                            sqrt_acp, sqrt_1m_acp):
    # text-loss inputs: CE(logits[:, :-1], ids[:, 1:], mask[:, 1:]); pack the
    # int targets and the 0/1 mask into a single [N_TOK, 2] int32 array.
    logits_2d = llm_logits[:, :-1, :].reshape(N_TOK, V).astype(jnp.float32)
    tgt_mask = jnp.stack(
        [input_ids[:, 1:].reshape(N_TOK), attention_mask[:, 1:].reshape(N_TOK)],
        axis=-1).astype(jnp.int32)                                    # [N_TOK, 2]

    # CLIP side: ids as a [B*LC, 1] VMEM vector; tables shipped bf16 and
    # zero-padded to 128 lanes (lane-dense MXU matmul + unmasked output store).
    ids2d = clip_ids.reshape(B * LC, 1).astype(jnp.int32)
    tok_pad = jnp.pad(clip_token_emb.astype(jnp.bfloat16), ((0, 0), (0, DP - D)))
    pos_pad = jnp.pad(clip_pos_emb.astype(jnp.bfloat16), ((0, 0), (0, DP - D)))

    # diffusion side: latents+noises merged into one [2, B, CHW] bf16 array;
    # per-batch noise scales gathered in the wrapper (O(B) scalars) with the
    # VAE scaling factor folded into sqrt(alphas_cumprod)[t].
    lat_noise = jnp.stack([latents.reshape(B, CHW), noises.reshape(B, CHW)], axis=0)
    sa = jnp.take(sqrt_acp, timesteps).astype(jnp.float32) * VAE_SCALING
    s1 = jnp.take(sqrt_1m_acp, timesteps).astype(jnp.float32)
    scales = jnp.concatenate([sa, s1], axis=0)                        # [2*B] f32

    vmem = pltpu.MemorySpace.VMEM
    smem = pltpu.MemorySpace.SMEM

    loss, emb_pad, noisy = pl.pallas_call(
        fused_forward_kernel,
        out_shape=(
            jax.ShapeDtypeStruct((1,), jnp.float32),            # total loss (SMEM)
            jax.ShapeDtypeStruct((B * LC, DP), jnp.bfloat16),   # clip embeds (padded)
            jax.ShapeDtypeStruct((B, CHW), jnp.bfloat16),       # noisy latents
        ),
        in_specs=[
            pl.BlockSpec(memory_space=vmem),   # logits
            pl.BlockSpec(memory_space=vmem),   # packed targets + mask
            pl.BlockSpec(memory_space=vmem),   # clip ids
            pl.BlockSpec(memory_space=vmem),   # token embedding table (bf16)
            pl.BlockSpec(memory_space=vmem),   # position embedding table (bf16)
            pl.BlockSpec(memory_space=vmem),   # stacked latents + noises
            pl.BlockSpec(memory_space=smem),   # packed sqrt(acp)*scale | sqrt(1-acp)
        ],
        out_specs=(
            pl.BlockSpec(memory_space=smem),
            pl.BlockSpec(memory_space=vmem),
            pl.BlockSpec(memory_space=vmem),
        ),
    )(logits_2d, tgt_mask, ids2d, tok_pad, pos_pad, lat_noise, scales)

    return {
        "loss": loss[0],
        "imgs_desc_embeddings": emb_pad[:, :D].reshape(B, LC, D),
        "noisy_latents": noisy.reshape(B, C, H, W),
    }


# ---------------------------------- main -------------------------------------
if __name__ == "__main__":
    key = jax.random.PRNGKey(0)
    ks = jax.random.split(key, 10)

    # synthetic "LLM" outputs / tokenized dialogues
    llm_logits = jax.random.normal(ks[0], (B, T, V), dtype=jnp.float32)
    input_ids = jax.random.randint(ks[1], (B, T), 0, V, dtype=jnp.int32)
    # left padding (padding_side='left'): batch 0 pads 3 tokens, batch 1 pads 0
    pad_lens = jnp.array([3, 0], dtype=jnp.int32)
    pos = jnp.arange(T, dtype=jnp.int32)[None, :]
    attention_mask = (pos >= pad_lens[:, None]).astype(jnp.int32)        # [B, T]

    # synthetic CLIP-side parameters (deterministic init, no checkpoint load)
    clip_ids = jax.random.randint(ks[2], (B, LC), 0, VC, dtype=jnp.int32)
    clip_token_emb = (0.02 * jax.random.normal(ks[3], (VC, D))).astype(jnp.bfloat16)
    clip_pos_emb = (0.02 * jax.random.normal(ks[4], (LC, D))).astype(jnp.bfloat16)

    # synthetic VAE latents (stand-in for vae.encode(images).latent_dist.sample())
    latents = jax.random.normal(ks[5], (B, C, H, W)).astype(jnp.bfloat16)
    noises = jax.random.normal(ks[6], (B, C, H, W)).astype(jnp.bfloat16)
    timesteps = jax.random.randint(ks[7], (B,), 0, NUM_TRAIN_TIMESTEPS,
                                   dtype=jnp.int32)

    # DDPM scheduler tables (scaled_linear betas, as in Stable Diffusion)
    betas = jnp.linspace(0.00085 ** 0.5, 0.012 ** 0.5, NUM_TRAIN_TIMESTEPS,
                         dtype=jnp.float32) ** 2
    alphas_cumprod = jnp.cumprod(1.0 - betas)
    sqrt_acp = jnp.sqrt(alphas_cumprod).astype(jnp.float32)
    sqrt_1m_acp = jnp.sqrt(1.0 - alphas_cumprod).astype(jnp.float32)

    fwd = jax.jit(joint_generater_forward)
    out = fwd(llm_logits, input_ids, attention_mask,
              clip_ids, clip_token_emb, clip_pos_emb,
              latents, noises, timesteps, sqrt_acp, sqrt_1m_acp)
    jax.block_until_ready(out)
    assert jnp.isfinite(out["loss"]).item()
    print("KERNEL_OK")
</pallas_src>

<mosaic_0001>
module attributes {stable_mosaic.version = 11 : i64} {
  func.func @fused_forward_kernel(%arg0: memref<30x128xf32, #tpu.memory_space<vmem>>, %arg1: memref<30x2xi32, #tpu.memory_space<vmem>>, %arg2: memref<16x1xi32, #tpu.memory_space<vmem>>, %arg3: memref<128x128xbf16, #tpu.memory_space<vmem>>, %arg4: memref<8x128xbf16, #tpu.memory_space<vmem>>, %arg5: memref<2x2x256xbf16, #tpu.memory_space<vmem>>, %arg6: memref<4xf32, #tpu.memory_space<smem>>, %arg7: memref<1xf32, #tpu.memory_space<smem>>, %arg8: memref<16x128xbf16, #tpu.memory_space<vmem>>, %arg9: memref<2x256xbf16, #tpu.memory_space<vmem>>) attributes {dimension_semantics = [], scalar_prefetch = 0 : i64, scratch_operands = 0 : i64, tpu.core_type = #tpu.core_type<tc>} {
    %c0 = arith.constant 0 : index
    %c0_0 = arith.constant 0 : index
    %0 = vector.load %arg0[%c0, %c0_0] : memref<30x128xf32, #tpu.memory_space<vmem>>, vector<30x128xf32>
    %c0_1 = arith.constant 0 : index
    %c0_2 = arith.constant 0 : index
    %1 = vector.load %arg1[%c0_1, %c0_2] : memref<30x2xi32, #tpu.memory_space<vmem>>, vector<30x2xi32>
    %2 = vector.extract_strided_slice %1 {offsets = [0, 0], sizes = [30, 1], strides = [1, 1]} : vector<30x2xi32> to vector<30x1xi32>
    %3 = vector.extract_strided_slice %1 {offsets = [0, 1], sizes = [30, 1], strides = [1, 1]} : vector<30x2xi32> to vector<30x1xi32>
    %4 = arith.sitofp %3 : vector<30x1xi32> to vector<30x1xf32>
    %cst = arith.constant dense<0xFF800000> : vector<30xf32>
    %5 = vector.multi_reduction <maximumf>, %0, %cst [1] : vector<30x128xf32> to vector<30xf32>
    %6 = vector.shape_cast %5 : vector<30xf32> to vector<30x1xf32>
    %7 = vector.broadcast %6 : vector<30x1xf32> to vector<30x128xf32>
    %8 = arith.subf %0, %7 : vector<30x128xf32>
    %9 = math.exp %8 : vector<30x128xf32>
    %cst_3 = arith.constant dense<0.000000e+00> : vector<30xf32>
    %10 = vector.multi_reduction <add>, %9, %cst_3 [1] : vector<30x128xf32> to vector<30xf32>
    %11 = vector.shape_cast %10 : vector<30xf32> to vector<30x1xf32>
    %12 = math.log %11 : vector<30x1xf32>
    %13 = arith.addf %6, %12 : vector<30x1xf32>
    %14 = tpu.iota {dimensions = array<i32: 1>} : vector<30x128xi32>
    %15 = vector.broadcast %2 : vector<30x1xi32> to vector<30x128xi32>
    %16 = arith.cmpi eq, %14, %15 : vector<30x128xi32>
    %cst_4 = arith.constant 0.000000e+00 : f32
    %17 = vector.broadcast %cst_4 : f32 to vector<30x128xf32>
    %18 = arith.select %16, %0, %17 : vector<30x128xi1>, vector<30x128xf32>
    %cst_5 = arith.constant dense<0.000000e+00> : vector<30xf32>
    %19 = vector.multi_reduction <add>, %18, %cst_5 [1] : vector<30x128xf32> to vector<30xf32>
    %20 = vector.shape_cast %19 : vector<30xf32> to vector<30x1xf32>
    %21 = arith.subf %13, %20 : vector<30x1xf32>
    %22 = arith.mulf %21, %4 : vector<30x1xf32>
    %23 = vector.shape_cast %22 : vector<30x1xf32> to vector<1x30x1xf32>
    %cst_6 = arith.constant dense<0.000000e+00> : vector<1xf32>
    %24 = vector.multi_reduction <add>, %23, %cst_6 [1, 2] : vector<1x30x1xf32> to vector<1xf32>
    %25 = vector.shape_cast %24 : vector<1xf32> to vector<1x1x1xf32>
    %26 = vector.extract %25[0, 0, 0] : f32 from vector<1x1x1xf32>
    %27 = vector.shape_cast %4 : vector<30x1xf32> to vector<1x30x1xf32>
    %cst_7 = arith.constant dense<0.000000e+00> : vector<1xf32>
    %28 = vector.multi_reduction <add>, %27, %cst_7 [1, 2] : vector<1x30x1xf32> to vector<1xf32>
    %29 = vector.shape_cast %28 : vector<1xf32> to vector<1x1x1xf32>
    %30 = vector.extract %29[0, 0, 0] : f32 from vector<1x1x1xf32>
    %cst_8 = arith.constant 0.000000e+00 : f32
    %31 = arith.cmpf ogt, %30, %cst_8 : f32
    %cst_9 = arith.constant 1.000000e+00 : f32
    %32 = arith.select %31, %30, %cst_9 : f32
    %cst_10 = arith.constant 0.000000e+00 : f32
    %33 = arith.cmpf ogt, %30, %cst_10 : f32
    %34 = arith.divf %26, %32 : f32
    %cst_11 = arith.constant 0.000000e+00 : f32
    %35 = arith.select %33, %34, %cst_11 : f32
    %c0_12 = arith.constant 0 : index
    %c0_13 = arith.constant 0 : index
    %36 = vector.load %arg2[%c0_12, %c0_13] : memref<16x1xi32, #tpu.memory_space<vmem>>, vector<16x1xi32>
    %37 = tpu.iota {dimensions = array<i32: 1>} : vector<16x128xi32>
    %38 = vector.broadcast %36 : vector<16x1xi32> to vector<16x128xi32>
    %39 = arith.cmpi eq, %37, %38 : vector<16x128xi32>
    %cst_14 = arith.constant 1.000000e+00 : f32
    %cst_15 = arith.constant 0.000000e+00 : f32
    %40 = vector.broadcast %cst_14 : f32 to vector<16x128xf32>
    %41 = vector.broadcast %cst_15 : f32 to vector<16x128xf32>
    %42 = arith.select %39, %40, %41 : vector<16x128xi1>, vector<16x128xf32>
    %43 = arith.truncf %42 : vector<16x128xf32> to vector<16x128xbf16>
    %c0_16 = arith.constant 0 : index
    %c0_17 = arith.constant 0 : index
    %44 = vector.load %arg3[%c0_16, %c0_17] : memref<128x128xbf16, #tpu.memory_space<vmem>>, vector<128x128xbf16>
    %cst_18 = arith.constant dense<0.000000e+00> : vector<16x128xf32>
    %45 = tpu.matmul %43, %44, %cst_18 {dimension_numbers = #tpu.dot_dimension_numbers<[1], [0], [0], [1], [0, 0, 1, 1], [], []>} : vector<16x128xbf16>, vector<128x128xbf16>, vector<16x128xf32> -> vector<16x128xf32>
    %c0_19 = arith.constant 0 : index
    %c0_20 = arith.constant 0 : index
    %46 = vector.load %arg4[%c0_19, %c0_20] : memref<8x128xbf16, #tpu.memory_space<vmem>>, vector<8x128xbf16>
    %47 = arith.extf %46 : vector<8x128xbf16> to vector<8x128xf32>
    %48 = tpu.concatenate %47, %47 in 0 : vector<8x128xf32>, vector<8x128xf32> -> vector<16x128xf32>
    %49 = arith.addf %45, %48 : vector<16x128xf32>
    %50 = arith.truncf %49 : vector<16x128xf32> to vector<16x128xbf16>
    %c0_21 = arith.constant 0 : index
    %c0_22 = arith.constant 0 : index
    %51 = vector.load %arg8[%c0_21, %c0_22] : memref<16x128xbf16, #tpu.memory_space<vmem>>, vector<16x128xbf16>
    tpu.vector_store %arg8[%c0_21, %c0_22], %50 {strides = array<i32>} : memref<16x128xbf16, #tpu.memory_space<vmem>>, vector<16x128xbf16>,
    %c0_23 = arith.constant 0 : index
    %c0_24 = arith.constant 0 : index
    %c0_25 = arith.constant 0 : index
    %52 = vector.load %arg5[%c0_23, %c0_24, %c0_25] : memref<2x2x256xbf16, #tpu.memory_space<vmem>>, vector<1x2x256xbf16>
    %53 = vector.shape_cast %52 : vector<1x2x256xbf16> to vector<2x256xbf16>
    %54 = arith.extf %53 : vector<2x256xbf16> to vector<2x256xf32>
    %c1 = arith.constant 1 : index
    %c0_26 = arith.constant 0 : index
    %c0_27 = arith.constant 0 : index
    %55 = vector.load %arg5[%c1, %c0_26, %c0_27] : memref<2x2x256xbf16, #tpu.memory_space<vmem>>, vector<1x2x256xbf16>
    %56 = vector.shape_cast %55 : vector<1x2x256xbf16> to vector<2x256xbf16>
    %57 = arith.extf %56 : vector<2x256xbf16> to vector<2x256xf32>
    %58 = tpu.iota {dimensions = array<i32: 0>} : vector<2x256xi32>
    %cst_28 = arith.constant 0.000000e+00 : f32
    %59 = vector.broadcast %cst_28 : f32 to vector<2x256xf32>
    %cst_29 = arith.constant 0.000000e+00 : f32
    %60 = vector.broadcast %cst_29 : f32 to vector<2x256xf32>
    %c0_i32 = arith.constant 0 : i32
    %61 = vector.broadcast %c0_i32 : i32 to vector<2x256xi32>
    %62 = arith.cmpi eq, %58, %61 : vector<2x256xi32>
    %c0_30 = arith.constant 0 : index
    %63 = memref.load %arg6[%c0_30] : memref<4xf32, #tpu.memory_space<smem>>
    %64 = vector.broadcast %63 : f32 to vector<2x256xf32>
    %65 = arith.select %62, %64, %59 : vector<2x256xi1>, vector<2x256xf32>
    %c0_i32_31 = arith.constant 0 : i32
    %66 = vector.broadcast %c0_i32_31 : i32 to vector<2x256xi32>
    %67 = arith.cmpi eq, %58, %66 : vector<2x256xi32>
    %c2 = arith.constant 2 : index
    %68 = memref.load %arg6[%c2] : memref<4xf32, #tpu.memory_space<smem>>
    %69 = vector.broadcast %68 : f32 to vector<2x256xf32>
    %70 = arith.select %67, %69, %60 : vector<2x256xi1>, vector<2x256xf32>
    %c1_i32 = arith.constant 1 : i32
    %71 = vector.broadcast %c1_i32 : i32 to vector<2x256xi32>
    %72 = arith.cmpi eq, %58, %71 : vector<2x256xi32>
    %c1_32 = arith.constant 1 : index
    %73 = memref.load %arg6[%c1_32] : memref<4xf32, #tpu.memory_space<smem>>
    %74 = vector.broadcast %73 : f32 to vector<2x256xf32>
    %75 = arith.select %72, %74, %65 : vector<2x256xi1>, vector<2x256xf32>
    %c1_i32_33 = arith.constant 1 : i32
    %76 = vector.broadcast %c1_i32_33 : i32 to vector<2x256xi32>
    %77 = arith.cmpi eq, %58, %76 : vector<2x256xi32>
    %c3 = arith.constant 3 : index
    %78 = memref.load %arg6[%c3] : memref<4xf32, #tpu.memory_space<smem>>
    %79 = vector.broadcast %78 : f32 to vector<2x256xf32>
    %80 = arith.select %77, %79, %70 : vector<2x256xi1>, vector<2x256xf32>
    %81 = arith.mulf %75, %54 : vector<2x256xf32>
    %82 = arith.mulf %80, %57 : vector<2x256xf32>
    %83 = arith.addf %81, %82 : vector<2x256xf32>
    %84 = arith.truncf %83 : vector<2x256xf32> to vector<2x256xbf16>
    %c0_34 = arith.constant 0 : index
    %c0_35 = arith.constant 0 : index
    %85 = vector.load %arg9[%c0_34, %c0_35] : memref<2x256xbf16, #tpu.memory_space<vmem>>, vector<2x256xbf16>
    tpu.vector_store %arg9[%c0_34, %c0_35], %84 {strides = array<i32>} : memref<2x256xbf16, #tpu.memory_space<vmem>>, vector<2x256xbf16>,
    %86 = arith.subf %83, %57 : vector<2x256xf32>
    %87 = arith.mulf %86, %86 : vector<2x256xf32>
    %88 = vector.shape_cast %87 : vector<2x256xf32> to vector<1x2x256xf32>
    %cst_36 = arith.constant dense<0.000000e+00> : vector<1xf32>
    %89 = vector.multi_reduction <add>, %88, %cst_36 [1, 2] : vector<1x2x256xf32> to vector<1xf32>
    %90 = vector.shape_cast %89 : vector<1xf32> to vector<1x1x1xf32>
    %91 = vector.extract %90[0, 0, 0] : f32 from vector<1x1x1xf32>
    %cst_37 = arith.constant 0.001953125 : f32
    %92 = arith.mulf %91, %cst_37 : f32
    %93 = arith.addf %35, %92 : f32
    %c0_38 = arith.constant 0 : index
    %94 = memref.load %arg7[%c0_38] : memref<1xf32, #tpu.memory_space<smem>>
    memref.store %93, %arg7[%c0_38] : memref<1xf32, #tpu.memory_space<smem>>
    return
  }
}

</mosaic_0001>

<llo_original>
// kernel: joint_generater_forward.1
$region0: #{joint_generater_forward.1}
  #allocation0 [shape = 'u32[]', space=smem, size = 0x4, offset = 0x4, fixed_abs, tag = 'smem constant byte address 0x4 - core index']
  #allocation1 [shape = 'u32[144,128]{1,0:T(1,128)}', space=vmem, size = 0x12000, scoped, tag = 'internal scratch']
  %s0 = inlined_call_operand.vmem [shape: f32[30,128], index: 0, kind: input, shape index: {}]
  %s1 = inlined_call_operand.vmem [shape: s32[30,2], index: 1, kind: input, shape index: {}]
  %s2 = inlined_call_operand.vmem [shape: s32[16,1], index: 2, kind: input, shape index: {}]
  %s3 = inlined_call_operand.vmem [shape: bf16[128,128], index: 3, kind: input, shape index: {}]
  %s4 = inlined_call_operand.vmem [shape: bf16[8,128], index: 4, kind: input, shape index: {}]
  %s5 = inlined_call_operand.vmem [shape: bf16[2,2,256], index: 5, kind: input, shape index: {}]
  %s6 = inlined_call_operand.vmem [shape: f32[4], index: 6, kind: input, shape index: {}]
  %s7 = inlined_call_operand.hbm [shape: f32[1], index: 7, kind: output, shape index: {0}]
  %s8 = inlined_call_operand.vmem [shape: bf16[16,128], index: 8, kind: output, shape index: {1}]
  %s9 = inlined_call_operand.vmem [shape: bf16[2,256], index: 9, kind: output, shape index: {2}]
  %10 = xla_tuple %s7, %s8, %s9
  %s11 = sld [smem:[#allocation0]]
  $region58: #{joint_generater_forward.1} parent=0
    _
  %s13 = ssub.s32 1, %s11
  %s14 = scalar_select 0, %s13, %s11
  $region1: #{joint_generater_forward.1} parent=0
    #allocation2 [shape = 'u8[512]{0}', space=smem, size = 0x200, scoped, tag = 'input window, operand 6, single buffered']
    #allocation3 [shape = 's32[1]{0}', space=sflag, size = 0x4, scoped, tag = 'scoped memory for joint_generater_forward.1']
    #allocation4 [shape = 's32[1]{0}', space=sflag, size = 0x4, scoped, tag = 'scoped memory for joint_generater_forward.1']
    #allocation5 [shape = 'u8[512]{0}', space=smem, size = 0x200, scoped, tag = 'output window, operand 0, single buffered']
    %15 = vsyncpa [#allocation4], 0
    %16 = vsyncpa [#allocation3], 0
    // Predicated region
    $region2: #{joint_generater_forward.1} parent=1 // pred_check
      _
    $region3: #{joint_generater_forward.1} parent=1 // pred_check_branch
      %18 = sbr.rel (0) target = $region5
    $region4: #{joint_generater_forward.1} parent=1 // pred_region
      _
    $region5: #{joint_generater_forward.1} parent=1 // pred_fallthru
      _
    // Predicated region
    $region6: #{joint_generater_forward.1} parent=1 // pred_check
      _
    $region7: #{joint_generater_forward.1} parent=1 // pred_check_branch
      %20 = sbr.rel (0) target = $region9
    $region8: #{joint_generater_forward.1} parent=1 // pred_region
      _
    $region9: #{joint_generater_forward.1} parent=1 // pred_fallthru
      _
    // Predicated region
    $region10: #{joint_generater_forward.1} parent=1 // pred_check
      _
    $region11: #{joint_generater_forward.1} parent=1 // pred_check_branch
      %22 = sbr.rel (0) target = $region13
    $region12: #{joint_generater_forward.1} parent=1 // pred_region
      _
    $region13: #{joint_generater_forward.1} parent=1 // pred_fallthru
      _
    // Predicated region
    $region14: #{joint_generater_forward.1} parent=1 // pred_check
      _
    $region15: #{joint_generater_forward.1} parent=1 // pred_check_branch
      %24 = sbr.rel (0) target = $region17
    $region16: #{joint_generater_forward.1} parent=1 // pred_region
      _
    $region17: #{joint_generater_forward.1} parent=1 // pred_fallthru
      _
    // Predicated region
    $region18: #{joint_generater_forward.1} parent=1 // pred_check
      _
    $region19: #{joint_generater_forward.1} parent=1 // pred_check_branch
      %26 = sbr.rel (0) target = $region21
    $region20: #{joint_generater_forward.1} parent=1 // pred_region
      _
    $region21: #{joint_generater_forward.1} parent=1 // pred_fallthru
      _
    // Predicated region
    $region22: #{joint_generater_forward.1} parent=1 // pred_check
      _
    $region23: #{joint_generater_forward.1} parent=1 // pred_check_branch
      %28 = sbr.rel (0) target = $region25
    $region24: #{joint_generater_forward.1} parent=1 // pred_region
      _
    $region25: #{joint_generater_forward.1} parent=1 // pred_fallthru
      _
    // Predicated region
    $region26: #{joint_generater_forward.1} parent=1 // pred_check
      _
    $region27: #{joint_generater_forward.1} parent=1 // pred_check_branch
      %30 = sbr.rel (0) target = $region29
    $region28: #{joint_generater_forward.1} parent=1 // pred_region
      %s32 = ssub.s32 16, 16
      %33 = vsyncadd [#allocation4], %s32
      %s35 = sshll.u32 %s6, 4
      %s36 = int_to_ptr.vmem [resolvable:$true] %s35
      %38 = dma.vmem_to_smem %s36, 16, [#allocation2], [#allocation4]
    $region29: #{joint_generater_forward.1} parent=1 // pred_fallthru
      _
    // Predicated region
    $region30: #{joint_generater_forward.1} parent=1 // pred_check
      _
    $region31: #{joint_generater_forward.1} parent=1 // pred_check_branch
      %40 = sbr.rel (0) target = $region33
    $region32: #{joint_generater_forward.1} parent=1 // pred_region
      %41 = dma.done [#allocation4], 16
    $region33: #{joint_generater_forward.1} parent=1 // pred_fallthru
      _
    %42 = sfence
    %v44 = vld [vmem:[%s0] sm:$0xff]
    %v45 = vld [vmem:[%s0 + $0x8] sm:$0xff]
    %v46 = vld [vmem:[%s0 + $0x10] sm:$0xff]
    %v47 = vld [vmem:[%s0 + $0x18] sm:$0x3f]
    %v48 = vld [vmem:[%s1] sm:$0xff]
    %v49 = vld [vmem:[%s1 + $0x8] sm:$0xff]
    %v50 = vld [vmem:[%s1 + $0x10] sm:$0xff]
    %v51 = vld [vmem:[%s1 + $0x18] sm:$0x3f]
    %v52 = vcvt.s32.f32 %v48
    %v53 = vcvt.s32.f32 %v49
    %v54 = vcvt.s32.f32 %v50
    %v55 = vcvt.s32.f32 %v51
    %56 = vmax.xlane.f32.xlu0 %v44
    %v57 = vpop.xlane.xlu0 %56
    %58 = vmax.xlane.f32.xlu0 %v45
    %v59 = vpop.xlane.xlu0 %58
    %60 = vmax.xlane.f32.xlu0 %v46
    %v61 = vpop.xlane.xlu0 %60
    %vm62 = vcmask 1045504
    %v63 = vsel %vm62, %v47, -inf
    %64 = vmax.xlane.f32.xlu0 %v63
    %v65 = vpop.xlane.xlu0 %64
    %v66 = vsub.f32 %v44, %v57
    %v67 = vsub.f32 %v45, %v59
    %v68 = vsub.f32 %v46, %v61
    %v69 = vsub.f32 %v47, %v65
    %v70 = vmul.f32 %v66, 1.442695
    %v71 = vpow.pop %v70
    %v72 = vmul.f32 %v67, 1.442695
    %v73 = vpow.pop %v72
    %v74 = vmul.f32 %v68, 1.442695
    %v75 = vpow.pop %v74
    %v76 = vmul.f32 %v69, 1.442695
    %v77 = vpow.pop %v76
    %78 = vadd.xlane.f32.xlu0 %v71
    %v79 = vpop.xlane.xlu0 %78
    %80 = vadd.xlane.f32.xlu0 %v73
    %v81 = vpop.xlane.xlu0 %80
    %82 = vadd.xlane.f32.xlu0 %v75
    %v83 = vpop.xlane.xlu0 %82
    %v84 = vsel %vm62, %v77, 0.0
    %85 = vadd.xlane.f32.xlu0 %v84
    %v86 = vpop.xlane.xlu0 %85
    %v87 = vlog2.pop %v79
    %v88 = vmul.f32 %v87, 0.6931472
    %v89 = vlog2.pop %v81
    %v90 = vmul.f32 %v89, 0.6931472
    %v91 = vlog2.pop %v83
    %v92 = vmul.f32 %v91, 0.6931472
    %v93 = vlog2.pop %v86
    %v94 = vmul.f32 %v93, 0.6931472
    %v95 = vadd.f32 %v57, %v88
    %v96 = vadd.f32 %v59, %v90
    %v97 = vadd.f32 %v61, %v92
    %v98 = vadd.f32 %v65, %v94
    %v99 = vlaneseq
    %v100 = vand.u32 %v99, 127
    %101 = vset.pattern.permute.xlu0 0
    %102 = vperm.xlu0 %101, %v48
    %v103 = vpop.permute.xlu0 %102
    %104 = vset.pattern.permute.xlu0 0
    %105 = vperm.xlu0 %104, %v49
    %v106 = vpop.permute.xlu0 %105
    %107 = vset.pattern.permute.xlu0 0
    %108 = vperm.xlu0 %107, %v50
    %v109 = vpop.permute.xlu0 %108
    %110 = vset.pattern.permute.xlu0 0
    %111 = vperm.xlu0 %110, %v51
    %v112 = vpop.permute.xlu0 %111
    %vm113 = vcmp.eq.s32.totalorder %v100, %v103
    %vm114 = vcmp.eq.s32.totalorder %v100, %v106
    %vm115 = vcmp.eq.s32.totalorder %v100, %v109
    %vm116 = vcmp.eq.s32.totalorder %v100, %v112
    %v117 = vsel %vm113, %v44, 0.0
    %v118 = vsel %vm114, %v45, 0.0
    %v119 = vsel %vm115, %v46, 0.0
    %v120 = vsel %vm116, %v47, 0.0
    %121 = vadd.xlane.f32.xlu0 %v117
    %v122 = vpop.xlane.xlu0 %121
    %123 = vadd.xlane.f32.xlu0 %v118
    %v124 = vpop.xlane.xlu0 %123
    %125 = vadd.xlane.f32.xlu0 %v119
    %v126 = vpop.xlane.xlu0 %125
    %v127 = vsel %vm62, %v120, 0.0
    %128 = vadd.xlane.f32.xlu0 %v127
    %v129 = vpop.xlane.xlu0 %128
    %v130 = vsub.f32 %v95, %v122
    %v131 = vsub.f32 %v96, %v124
    %v132 = vsub.f32 %v97, %v126
    %v133 = vsub.f32 %v98, %v129
    %v134 = vmul.f32 %v130, %v52
    %v135 = vmul.f32 %v131, %v53
    %v136 = vmul.f32 %v132, %v54
    %v137 = vmul.f32 %v133, %v55
    %142 = vrot.lane.b32.xlu0 %v134, 127
    %v143 = vpop.permute.xlu0 %142
    %144 = vrot.lane.b32.xlu0 %v135, 127
    %v145 = vpop.permute.xlu0 %144
    %146 = vrot.lane.b32.xlu0 %v136, 127
    %v147 = vpop.permute.xlu0 %146
    %148 = vrot.lane.b32.xlu0 %v137, 127
    %v149 = vpop.permute.xlu0 %148
    %vm154 = vcmask 7168
    %v155 = vsel %vm154, %v143, 0.0
    %v156 = vsel %vm154, %v145, 0.0
    %v157 = vadd.f32 %v155, %v156
    %v158 = vsel %vm154, %v147, 0.0
    %v159 = vadd.f32 %v157, %v158
    %vm160 = vcmask 5120
    %v161 = vsel %vm160, %v149, 0.0
    %v162 = vadd.f32 %v159, %v161
    %163 = vadd.xlane.f32.xlu0 %v162
    %v164 = vpop.xlane.xlu0 %163
    %v165 = vrot.slane %v164, 4
    %v166 = vadd.f32 %v164, %v165
    %v167 = vrot.slane %v166, 2
    %v168 = vadd.f32 %v166, %v167
    %v169 = vrot.slane %v168, 1
    %v170 = vadd.f32 %v168, %v169
    %s171 = vtos %v170
    %176 = vrot.lane.b32.xlu0 %v52, 127
    %v177 = vpop.permute.xlu0 %176
    %178 = vrot.lane.b32.xlu0 %v53, 127
    %v179 = vpop.permute.xlu0 %178
    %180 = vrot.lane.b32.xlu0 %v54, 127
    %v181 = vpop.permute.xlu0 %180
    %182 = vrot.lane.b32.xlu0 %v55, 127
    %v183 = vpop.permute.xlu0 %182
    %v188 = vsel %vm154, %v177, 0.0
    %v189 = vsel %vm154, %v179, 0.0
    %v190 = vadd.f32 %v188, %v189
    %v191 = vsel %vm154, %v181, 0.0
    %v192 = vadd.f32 %v190, %v191
    %v193 = vsel %vm160, %v183, 0.0
    %v194 = vadd.f32 %v192, %v193
    %195 = vadd.xlane.f32.xlu0 %v194
    %v196 = vpop.xlane.xlu0 %195
    %v197 = vrot.slane %v196, 4
    %v198 = vadd.f32 %v196, %v197
    %v199 = vrot.slane %v198, 2
    %v200 = vadd.f32 %v198, %v199
    %v201 = vrot.slane %v200, 1
    %v202 = vadd.f32 %v200, %v201
    %s203 = vtos %v202
    %p204 = scmp.gt.f32.partialorder %s203, 0.0
    %s205 = scalar_select %p204, %s203, 1.0
    %v206 = vstv %s205
    %v207 = vrcp.pop %v206
    %s208 = vtos %v207
    %s209 = smul.f32 %s171, %s208
    %s210 = scalar_select %p204, %s209, 0.0
    %v211 = vld [vmem:[%s2] sm:$0xff]
    %v212 = vld [vmem:[%s2 + $0x8] sm:$0xff]
    %213 = vset.pattern.permute.xlu0 0
    %214 = vperm.xlu0 %213, %v211
    %v215 = vpop.permute.xlu0 %214
    %216 = vset.pattern.permute.xlu0 0
    %217 = vperm.xlu0 %216, %v212
    %v218 = vpop.permute.xlu0 %217
    %vm219 = vcmp.eq.s32.totalorder %v100, %v215
    %vm220 = vcmp.eq.s32.totalorder %v100, %v218
    %v221 = vsel %vm219, 1.0, 0.0
    %v222 = vsel %vm220, 1.0, 0.0
    %v223 = vpack.c.bf16 %v222, %v221
    %v224 = vld [vmem:[%s3] sm:$0xf]
    %v225 = vld [vmem:[%s3 + $0x4] sm:$0xf]
    %v226 = vld [vmem:[%s3 + $0x8] sm:$0xf]
    %v227 = vld [vmem:[%s3 + $0xc] sm:$0xf]
    %v228 = vld [vmem:[%s3 + $0x10] sm:$0xf]
    %v229 = vld [vmem:[%s3 + $0x14] sm:$0xf]
    %v230 = vld [vmem:[%s3 + $0x18] sm:$0xf]
    %v231 = vld [vmem:[%s3 + $0x1c] sm:$0xf]
    %v232 = vld [vmem:[%s3 + $0x20] sm:$0xf]
    %v233 = vld [vmem:[%s3 + $0x24] sm:$0xf]
    %v234 = vld [vmem:[%s3 + $0x28] sm:$0xf]
    %v235 = vld [vmem:[%s3 + $0x2c] sm:$0xf]
    %v236 = vld [vmem:[%s3 + $0x30] sm:$0xf]
    %v237 = vld [vmem:[%s3 + $0x34] sm:$0xf]
    %v238 = vld [vmem:[%s3 + $0x38] sm:$0xf]
    %v239 = vld [vmem:[%s3 + $0x3c] sm:$0xf]
    %v240 = vld [vmem:[%s4] sm:$0xf]
    %v241 = vunpack.c.l.bf16 %v240
    %v258 = vunpack.c.l.b16 %v224
    %v259 = vunpack.c.l.b16 %v225
    %v260 = vunpack.c.l.b16 %v226
    %v261 = vunpack.c.l.b16 %v227
    %v262 = vunpack.c.l.b16 %v228
    %v263 = vunpack.c.l.b16 %v229
    %v264 = vunpack.c.l.b16 %v230
    %v265 = vunpack.c.l.b16 %v231
    %v266 = vunpack.c.l.b16 %v232
    %v267 = vunpack.c.l.b16 %v233
    %v268 = vunpack.c.l.b16 %v234
    %v269 = vunpack.c.l.b16 %v235
    %v270 = vunpack.c.l.b16 %v236
    %v271 = vunpack.c.l.b16 %v237
    %v272 = vunpack.c.l.b16 %v238
    %v273 = vunpack.c.l.b16 %v239
    %v274 = vpack.c.b16 %v259, %v258
    %v275 = vpack.c.b16 %v261, %v260
    %v276 = vpack.c.b16 %v263, %v262
    %v277 = vpack.c.b16 %v265, %v264
    %v278 = vpack.c.b16 %v267, %v266
    %v279 = vpack.c.b16 %v269, %v268
    %v280 = vpack.c.b16 %v271, %v270
    %v281 = vpack.c.b16 %v273, %v272
    %290 = vmatprep.subr.bf16.mxu0 0
    %291 = vmatpush1.bf16.msra.mxu0 %v281
    %292 = vmatprep.subr.bf16.mxu0 0
    %293 = vmatpush1.bf16.msra.mxu0 %v280
    %294 = vmatprep.subr.bf16.mxu0 0
    %295 = vmatpush1.bf16.msra.mxu0 %v279
    %296 = vmatprep.subr.bf16.mxu0 0
    %297 = vmatpush1.bf16.msra.mxu0 %v278
    %298 = vmatprep.subr.bf16.mxu0 0
    %299 = vmatpush1.bf16.msra.mxu0 %v277
    %300 = vmatprep.subr.bf16.mxu0 0
    %301 = vmatpush1.bf16.msra.mxu0 %v276
    %302 = vmatprep.subr.bf16.mxu0 0
    %303 = vmatpush1.bf16.msra.mxu0 %v275
    %304 = vmatprep.subr.bf16.mxu0 0
    %305 = vmatpush1.bf16.msra.mxu0 %v274
    %306 = vmatprep.subr.bf16.mxu0 0
    %307 = vmatpush2.bf16.msra.mxu0 0
    %308 = vmatprep.subr.bf16.mxu0 0
    %309 = vmatpush2.bf16.msra.mxu0 0
    %310 = vmatprep.subr.bf16.mxu0 0
    %311 = vmatpush2.bf16.msra.mxu0 0
    %312 = vmatprep.subr.bf16.mxu0 0
    %313 = vmatpush2.bf16.msra.mxu0 0
    %314 = vmatprep.subr.bf16.mxu0 0
    %315 = vmatpush2.bf16.msra.mxu0 0
    %316 = vmatprep.subr.bf16.mxu0 0
    %317 = vmatpush2.bf16.msra.mxu0 0
    %318 = vmatprep.subr.bf16.mxu0 0
    %319 = vmatpush2.bf16.msra.mxu0 0
    %320 = vmatprep.subr.bf16.mxu0 0
    %321 = vmatpush2.bf16.msra.mxu0 0
    %322 = vmatprep.mubr.bf16.mxu0 0
    %323 = vmatmul.mubr.bf16.gmra.mxu0 %v223
    %v324 = vpop.f32.mrf.mxu0
    %v325 = vadd.f32 %v241, %v324
    %v326 = vpop.f32.mrf.mxu0
    %v327 = vpop.f32.mrf.mxu0
    %v328 = vadd.f32 %v241, %v327
    %v329 = vpop.f32.mrf.mxu0
    %330 = vdwg.mxu0
    %v331 = vpack.c.bf16 %v328, %v325
    %v333 = vunpack.c.l.b16 %v331
    %v334 = vunpack.c.h.b16 %v331
    %v335 = vpack.c.b16 %v333, %v333
    %v336 = vpack.c.b16 %v334, %v334
    %339 = vst [vmem:[%s8] sm:$0xf] %v335
    %340 = vst [vmem:[%s8 + $0x4] sm:$0xf] %v336
    %v341 = vld [vmem:[%s5] sm:$0x3]
    %v342 = vunpack.c.l.bf16 %v341
    %s343 = scalar_lea.vmem %s5, 2
    %v344 = vld [vmem:[%s343] sm:$0x3]
    %v345 = vunpack.c.l.bf16 %v344
    %v346 = vlaneseq
    %v347 = vshrl.u32 %v346, 7
    %vm348 = vcmp.eq.s32.totalorder %v347, 0
    %s349 = sld [smem:[#allocation2]]
    %v350 = vstv %s349
    %v351 = vsel %vm348, %v350, 0.0
    %s352 = sld [smem:[#allocation2 + $0x2]]
    %v353 = vstv %s352
    %v354 = vsel %vm348, %v353, 0.0
    %vm355 = vcmp.eq.s32.totalorder %v347, 1
    %s356 = sld [smem:[#allocation2 + $0x1]]
    %v357 = vstv %s356
    %v358 = vsel %vm355, %v357, %v351
    %s359 = sld [smem:[#allocation2 + $0x3]]
    %v360 = vstv %s359
    %v361 = vsel %vm355, %v360, %v354
    %v364 = vunpack.c.l.s4 1983009808
    %v365 = vunpack.c.0.s8 %v364
    %v366 = vlaneseq
    %v367 = vshrl.u32 %v366, 7
    %v368 = vsub.s32 %v365, %v367
    %v369 = vrot.slane %v342, %v368
    %v370 = vcombine.high %v369, %v369
    %v373 = vmul.f32 %v358, %v369
    %v374 = vmul.f32 %v358, %v370
    %v377 = vunpack.c.l.s4 1983009808
    %v378 = vunpack.c.0.s8 %v377
    %v379 = vlaneseq
    %v380 = vshrl.u32 %v379, 7
    %v381 = vsub.s32 %v378, %v380
    %v382 = vrot.slane %v345, %v381
    %v383 = vcombine.high %v382, %v382
    %v386 = vmul.f32 %v361, %v382
    %v387 = vmul.f32 %v361, %v383
    %v388 = vadd.f32 %v373, %v386
    %v389 = vadd.f32 %v374, %v387
    %v390 = vpack.c.bf16 %v388, %v388
    %v391 = vpack.c.bf16 %v389, %v389
    %v394 = vcombine.low %v390, %v391
    %v396 = vunpack.c.l.s4 1966171168
    %v397 = vunpack.c.0.s8 %v396
    %v398 = vlaneseq
    %v399 = vshrl.u32 %v398, 7
    %v400 = vsub.s32 %v397, %v399
    %v401 = vrot.slane %v394, %v400
    %v403 = vunpack.c.l.s4 1966171168
    %v404 = vunpack.c.0.s8 %v403
    %v405 = vlaneseq
    %v406 = vshrl.u32 %v405, 7
    %v407 = vsub.s32 %v404, %v406
    %v408 = vrot.slane %v401, %v407
    %410 = vst [vmem:[%s9] sm:$0x3] %v408
    %v411 = vsub.f32 %v388, %v382
    %v412 = vsub.f32 %v389, %v383
    %v413 = vmul.f32 %v411, %v411
    %v414 = vmul.f32 %v412, %v412
    %vm415 = vcmask 1041408
    %v416 = vsel %vm415, %v413, 0.0
    %v417 = vsel %vm415, %v414, 0.0
    %v418 = vadd.f32 %v416, %v417
    %419 = vadd.xlane.f32.xlu0 %v418
    %v420 = vpop.xlane.xlu0 %419
    %v421 = vrot.slane %v420, 4
    %v422 = vadd.f32 %v420, %v421
    %v423 = vrot.slane %v422, 2
    %v424 = vadd.f32 %v422, %v423
    %v425 = vrot.slane %v424, 1
    %v426 = vadd.f32 %v424, %v425
    %s427 = vtos %v426
    %s428 = smul.f32 %s427, 0.001953125
    %s429 = sadd.f32 %s210, %s428
    %s430 = scalar_lea.smem [#allocation5], 0
    %431 = sst [smem:[%s430]] %s429
    // Predicated region
    $region34: #{joint_generater_forward.1} parent=1 // pred_check
      _
    $region35: #{joint_generater_forward.1} parent=1 // pred_check_branch
      %433 = sbr.rel (0) target = $region37
    $region36: #{joint_generater_forward.1} parent=1 // pred_region
      %s435 = ssub.s32 16, 16
      %436 = vsyncadd [#allocation3], %s435
      %439 = dma.smem_to_hbm [#allocation5], 16, %s7, [#allocation3]
    $region37: #{joint_generater_forward.1} parent=1 // pred_fallthru
      _
    // Predicated region
    $region38: #{joint_generater_forward.1} parent=1 // pred_check
      _
    $region39: #{joint_generater_forward.1} parent=1 // pred_check_branch
      %441 = sbr.rel (0) target = $region41
    $region40: #{joint_generater_forward.1} parent=1 // pred_region
      _
    $region41: #{joint_generater_forward.1} parent=1 // pred_fallthru
      _
    // Predicated region
    $region42: #{joint_generater_forward.1} parent=1 // pred_check
      _
    $region43: #{joint_generater_forward.1} parent=1 // pred_check_branch
      %443 = sbr.rel (0) target = $region45
    $region44: #{joint_generater_forward.1} parent=1 // pred_region
      _
    $region45: #{joint_generater_forward.1} parent=1 // pred_fallthru
      _
    // Predicated region
    $region46: #{joint_generater_forward.1} parent=1 // pred_check
      _
    $region47: #{joint_generater_forward.1} parent=1 // pred_check_branch
      %445 = sbr.rel (0) target = $region49
    $region48: #{joint_generater_forward.1} parent=1 // pred_region
      %446 = dma.done [#allocation3], 16
    $region49: #{joint_generater_forward.1} parent=1 // pred_fallthru
      _
    // Predicated region
    $region50: #{joint_generater_forward.1} parent=1 // pred_check
      _
    $region51: #{joint_generater_forward.1} parent=1 // pred_check_branch
      %448 = sbr.rel (0) target = $region53
    $region52: #{joint_generater_forward.1} parent=1 // pred_region
      _
    $region53: #{joint_generater_forward.1} parent=1 // pred_fallthru
      _
    // Predicated region
    $region54: #{joint_generater_forward.1} parent=1 // pred_check
      _
    $region55: #{joint_generater_forward.1} parent=1 // pred_check_branch
      %450 = sbr.rel (0) target = $region57
    $region56: #{joint_generater_forward.1} parent=1 // pred_region
      _
    $region57: #{joint_generater_forward.1} parent=1 // pred_fallthru
      _
    %451 = sfence
    %452 = vsyncpa [#allocation3], 1
    %453 = vsyncpa [#allocation4], 1

</llo_original>
